<compile_context>
chip_gen: v5e
topology: v5e:2x2
jax: 0.10.0
libtpu: 0.0.40
codegen_flags: <defaults>
</compile_context>

<pallas_src>
import functools

import jax
import jax.numpy as jnp
from jax import lax
from jax.experimental import pallas as pl
from jax.experimental.pallas import tpu as pltpu

CPAD = 128                      # lane-dense class dimension (real classes = 5)
NEG_BIG = -1e30                 # "minus infinity" for padded logit columns


def _pick_tb(batch):
    """Largest batch tile (multiple of 8) dividing `batch`, capped for VMEM."""
    for tb in (512, 256, 128, 64, 32, 16, 8):
        if batch % tb == 0:
            return tb
    return batch


# --------------------------------------------------------------------------
# Inference kernel: probs = softmax(x @ W^T + b)
# --------------------------------------------------------------------------
def _linear_softmax_kernel(x_ref, wt_ref, b_ref, probs_ref):
    logits = jnp.dot(x_ref[...].astype(jnp.bfloat16), wt_ref[...],
                     preferred_element_type=jnp.float32) + b_ref[...]
    m = jnp.max(logits, axis=-1, keepdims=True)
    e = jnp.exp(logits - m)                      # padded cols -> exp(-1e30) = 0
    denom = jnp.sum(e, axis=-1, keepdims=True)
    inv = pl.reciprocal(denom, approx=True)      # EUP slot, off the VPU path
    probs_ref[...] = e * inv


# --------------------------------------------------------------------------
# Training kernel: per-tile sum of -log p(y)  (no probs writeback)
# --------------------------------------------------------------------------
def _linear_ce_kernel(x_ref, wt_ref, b_ref, y_ref, loss_ref):
    logits = jnp.dot(x_ref[...].astype(jnp.bfloat16), wt_ref[...],
                     preferred_element_type=jnp.float32) + b_ref[...]
    tb, cpad = logits.shape

    # Stable log-sum-exp over the (padded) class dim.
    m = jnp.max(logits, axis=-1, keepdims=True)
    e = jnp.exp(logits - m)
    lse = m + jnp.log(jnp.sum(e, axis=-1, keepdims=True))          # (TB, 1)

    # Vectorized label pick: one mask, one select, one reduction.
    # NOTE: labels are assumed to lie in [0, C); out-of-range labels would
    # select a padded (-1e30) column and blow up the loss (PyTorch raises).
    class_ids = lax.broadcasted_iota(jnp.int32, (tb, cpad), 1)
    mask = class_ids == y_ref[...]                                  # (TB, CPAD)
    label_logit = jnp.sum(jnp.where(mask, logits, 0.0),
                          axis=-1, keepdims=True)                   # (TB, 1)

    partial = jnp.sum(lse - label_logit, keepdims=True)             # (1, 1) NLL
    loss_ref[...] = jnp.broadcast_to(partial, (1, cpad))            # lane-dense


# --------------------------------------------------------------------------
# Wrapper: pad/cast params once, jit the two forward paths.
# --------------------------------------------------------------------------
def make_torch_model(weight, bias):
    """Returns (probs_fn, loss_fn) mirroring TorchModel.forward.

    weight: (C, D) float32 (PyTorch nn.Linear layout), bias: (C,) float32.
    probs_fn(x)   -> (B, C) softmax probabilities
    loss_fn(x, y) -> scalar mean cross-entropy
    """
    num_classes, in_dim = weight.shape
    assert num_classes <= CPAD

    # --- one-time layout & dtype prep (hoisted out of the forward path) ----
    wt_pad = jnp.zeros((in_dim, CPAD), jnp.bfloat16).at[:, :num_classes].set(
        weight.T.astype(jnp.bfloat16))
    b_pad = jnp.full((1, CPAD), NEG_BIG, jnp.float32).at[0, :num_classes].set(
        bias.astype(jnp.float32))

    @jax.jit
    def probs_fn(x):
        batch, d = x.shape
        tb = _pick_tb(batch)
        grid = (batch // tb,)
        cost = pl.CostEstimate(
            flops=2 * batch * d * CPAD,
            transcendentals=batch * CPAD,
            bytes_accessed=(x.size * 4 + wt_pad.size * 2 + b_pad.size * 4
                            + batch * CPAD * 4))
        probs = pl.pallas_call(
            _linear_softmax_kernel,
            out_shape=jax.ShapeDtypeStruct((batch, CPAD), jnp.float32),
            grid=grid,
            in_specs=[
                pl.BlockSpec((tb, d), lambda i: (i, 0)),
                pl.BlockSpec((d, CPAD), lambda i: (0, 0)),
                pl.BlockSpec((1, CPAD), lambda i: (0, 0)),
            ],
            out_specs=pl.BlockSpec((tb, CPAD), lambda i: (i, 0)),
            compiler_params=pltpu.CompilerParams(
                dimension_semantics=("parallel",)),
            cost_estimate=cost,
        )(x, wt_pad, b_pad)
        return probs[:, :num_classes]

    @jax.jit
    def loss_fn(x, y):
        batch, d = x.shape
        tb = _pick_tb(batch)
        num_tiles = batch // tb
        y_col = y.astype(jnp.int32).reshape(batch, 1)
        cost = pl.CostEstimate(
            flops=2 * batch * d * CPAD,
            transcendentals=batch * CPAD + batch,
            bytes_accessed=(x.size * 4 + wt_pad.size * 2 + b_pad.size * 4
                            + batch * 4 + num_tiles * CPAD * 4))
        partials = pl.pallas_call(
            _linear_ce_kernel,
            out_shape=jax.ShapeDtypeStruct((num_tiles, CPAD), jnp.float32),
            grid=(num_tiles,),
            in_specs=[
                pl.BlockSpec((tb, d), lambda i: (i, 0)),
                pl.BlockSpec((d, CPAD), lambda i: (0, 0)),
                pl.BlockSpec((1, CPAD), lambda i: (0, 0)),
                pl.BlockSpec((tb, 1), lambda i: (i, 0)),
            ],
            out_specs=pl.BlockSpec((1, CPAD), lambda i: (i, 0)),
            compiler_params=pltpu.CompilerParams(
                dimension_semantics=("parallel",)),
            cost_estimate=cost,
        )(x, wt_pad, b_pad, y_col)
        return jnp.sum(partials[:, 0]) / jnp.float32(batch)

    return probs_fn, loss_fn


if __name__ == "__main__":
    key = jax.random.PRNGKey(0)
    B, D, C = 8, 32, 5        # batch, input_size, classes (Linear(input_size, 5))

    kx, kw, kb, ky = jax.random.split(key, 4)
    x = jax.random.normal(kx, (B, D), dtype=jnp.float32)
    weight = jax.random.normal(kw, (C, D), dtype=jnp.float32) * 0.1  # (C, D)
    bias = jax.random.normal(kb, (C,), dtype=jnp.float32) * 0.1
    y = jax.random.randint(ky, (B,), 0, C, dtype=jnp.int32)

    probs_fn, loss_fn = make_torch_model(weight, bias)

    # inference path: softmax probabilities
    probs = jax.block_until_ready(probs_fn(x))
    # training path: mean cross-entropy loss
    loss = jax.block_until_ready(loss_fn(x, y))

    # pure-JAX reference using the same bf16 matmul-input numerics as the kernel
    xb = x.astype(jnp.bfloat16).astype(jnp.float32)
    wb = weight.astype(jnp.bfloat16).astype(jnp.float32)
    logits_ref = jnp.dot(xb, wb.T, precision=jax.lax.Precision.HIGHEST) + bias
    probs_ref = jax.nn.softmax(logits_ref, axis=-1)
    loss_ref = jnp.mean(
        -jnp.take_along_axis(jax.nn.log_softmax(logits_ref, axis=-1),
                             y[:, None], axis=-1))

    assert probs.shape == (B, C)
    # probs go through the EUP approximate reciprocal -> looser tolerance
    assert jnp.allclose(probs, probs_ref, atol=2e-2)
    assert jnp.allclose(jnp.sum(probs, axis=-1), 1.0, atol=2e-2)
    assert jnp.array_equal(jnp.argmax(probs, axis=-1),
                           jnp.argmax(probs_ref, axis=-1))
    # loss path uses exact log-sum-exp (no approx reciprocal) -> tight
    assert jnp.allclose(loss, loss_ref, atol=1e-3)

    print("KERNEL_OK")
</pallas_src>

<mosaic_0001>
module attributes {stable_mosaic.version = 11 : i64} {
  func.func @_linear_softmax_kernel(%arg0: i32, %arg1: memref<8x32xf32, #tpu.memory_space<vmem>>, %arg2: memref<32x128xbf16, #tpu.memory_space<vmem>>, %arg3: memref<1x128xf32, #tpu.memory_space<vmem>>, %arg4: memref<8x128xf32, #tpu.memory_space<vmem>>) attributes {dimension_semantics = [#tpu.dimension_semantics<parallel>], iteration_bounds = array<i64: 1>, scalar_prefetch = 0 : i64, scratch_operands = 0 : i64, tpu.core_type = #tpu.core_type<tc>, window_params = [{transform_indices = @transform_0, window_bounds = array<i64: 8, 32>}, {pipeline_mode = #tpu.pipeline_mode<synchronous>, transform_indices = @transform_1, window_bounds = array<i64: 32, 128>}, {pipeline_mode = #tpu.pipeline_mode<synchronous>, transform_indices = @transform_2, window_bounds = array<i64: 1, 128>}, {transform_indices = @transform_3, window_bounds = array<i64: 8, 128>}]} {
    %c0 = arith.constant 0 : index
    %c0_0 = arith.constant 0 : index
    %0 = vector.load %arg1[%c0, %c0_0] : memref<8x32xf32, #tpu.memory_space<vmem>>, vector<8x32xf32>
    %1 = arith.truncf %0 : vector<8x32xf32> to vector<8x32xbf16>
    %c0_1 = arith.constant 0 : index
    %c0_2 = arith.constant 0 : index
    %2 = vector.load %arg2[%c0_1, %c0_2] : memref<32x128xbf16, #tpu.memory_space<vmem>>, vector<32x128xbf16>
    %cst = arith.constant dense<0.000000e+00> : vector<8x128xf32>
    %3 = tpu.matmul %1, %2, %cst {dimension_numbers = #tpu.dot_dimension_numbers<[1], [0], [0], [1], [0, 0, 1, 1], [], []>} : vector<8x32xbf16>, vector<32x128xbf16>, vector<8x128xf32> -> vector<8x128xf32>
    %c0_3 = arith.constant 0 : index
    %c0_4 = arith.constant 0 : index
    %4 = vector.load %arg3[%c0_3, %c0_4] : memref<1x128xf32, #tpu.memory_space<vmem>>, vector<1x128xf32>
    %5 = vector.broadcast %4 : vector<1x128xf32> to vector<8x128xf32>
    %6 = arith.addf %3, %5 : vector<8x128xf32>
    %cst_5 = arith.constant dense<0xFF800000> : vector<8xf32>
    %7 = vector.multi_reduction <maximumf>, %6, %cst_5 [1] : vector<8x128xf32> to vector<8xf32>
    %8 = vector.shape_cast %7 : vector<8xf32> to vector<8x1xf32>
    %9 = vector.broadcast %8 : vector<8x1xf32> to vector<8x128xf32>
    %10 = arith.subf %6, %9 : vector<8x128xf32>
    %11 = math.exp %10 : vector<8x128xf32>
    %cst_6 = arith.constant dense<0.000000e+00> : vector<8xf32>
    %12 = vector.multi_reduction <add>, %11, %cst_6 [1] : vector<8x128xf32> to vector<8xf32>
    %13 = vector.shape_cast %12 : vector<8xf32> to vector<8x1xf32>
    %14 = tpu.reciprocal %13 {approx = true} : vector<8x1xf32> -> vector<8x1xf32>
    %15 = vector.broadcast %14 : vector<8x1xf32> to vector<8x128xf32>
    %16 = arith.mulf %11, %15 : vector<8x128xf32>
    %c0_7 = arith.constant 0 : index
    %c0_8 = arith.constant 0 : index
    %17 = vector.load %arg4[%c0_7, %c0_8] : memref<8x128xf32, #tpu.memory_space<vmem>>, vector<8x128xf32>
    tpu.vector_store %arg4[%c0_7, %c0_8], %16 {strides = array<i32>} : memref<8x128xf32, #tpu.memory_space<vmem>>, vector<8x128xf32>,
    return
  }
  func.func @transform_0(%arg0: i32) -> (i32, i32) {
    %c0_i32 = arith.constant 0 : i32
    %c0_i32_0 = arith.constant 0 : i32
    return %arg0, %c0_i32 : i32, i32
  }
  func.func @transform_1(%arg0: i32) -> (i32, i32) {
    %c0_i32 = arith.constant 0 : i32
    %c0_i32_0 = arith.constant 0 : i32
    %c0_i32_1 = arith.constant 0 : i32
    return %c0_i32, %c0_i32_0 : i32, i32
  }
  func.func @transform_2(%arg0: i32) -> (i32, i32) {
    %c0_i32 = arith.constant 0 : i32
    %c0_i32_0 = arith.constant 0 : i32
    %c0_i32_1 = arith.constant 0 : i32
    return %c0_i32, %c0_i32_0 : i32, i32
  }
  func.func @transform_3(%arg0: i32) -> (i32, i32) {
    %c0_i32 = arith.constant 0 : i32
    %c0_i32_0 = arith.constant 0 : i32
    return %arg0, %c0_i32 : i32, i32
  }
}

</mosaic_0001>

<llo_original>
// kernel: probs_fn.1
$region0: #{probs_fn.1}
  #allocation0 [shape = 'u32[]', space=smem, size = 0x4, offset = 0x4, fixed_abs, tag = 'smem constant byte address 0x4 - core index']
  #allocation1 [shape = 'u32[72,128]{1,0:T(1,128)}', space=vmem, size = 0x9000, scoped, tag = 'internal scratch']
  %s0 = inlined_call_operand.hbm [shape: f32[8,32], index: 0, kind: input, shape index: {}]
  %s1 = inlined_call_operand.hbm [shape: bf16[32,128], index: 1, kind: input, shape index: {}]
  %s2 = inlined_call_operand.vmem [shape: f32[1,128], index: 2, kind: input, shape index: {}]
  %s3 = inlined_call_operand.hbm [shape: f32[8,128], index: 3, kind: output, shape index: {}]
  %s4 = sld [smem:[#allocation0]]
  $region30: #{probs_fn.1} parent=0
    _
  %s6 = ssub.s32 1, %s4
  %s7 = scalar_select 0, %s6, %s4
  $region1: #{probs_fn.1} parent=0
    #allocation2 [shape = 'u8[4096]{0}', space=vmem, size = 0x1000, scoped, tag = 'input window, operand 0, single buffered']
    #allocation3 [shape = 's32[1]{0}', space=sflag, size = 0x4, scoped, tag = 'scoped memory for probs_fn.1']
    #allocation4 [shape = 's32[1]{0}', space=sflag, size = 0x4, scoped, tag = 'scoped memory for probs_fn.1']
    #allocation5 [shape = 'u8[8192]{0}', space=vmem, size = 0x2000, scoped, tag = 'input window, operand 1, single buffered']
    #allocation6 [shape = 's32[1]{0}', space=sflag, size = 0x4, scoped, tag = 'scoped memory for probs_fn.1']
    #allocation7 [shape = 'u8[4096]{0}', space=vmem, size = 0x1000, scoped, tag = 'output window, operand 0, single buffered']
    %8 = vsyncpa [#allocation3], 0
    %9 = vsyncpa [#allocation6], 0
    %10 = vsyncpa [#allocation4], 0
    // Predicated region
    $region2: #{probs_fn.1} parent=1 // pred_check
      _
    $region3: #{probs_fn.1} parent=1 // pred_check_branch
      %12 = sbr.rel (0) target = $region5
    $region4: #{probs_fn.1} parent=1 // pred_region
      %14 = vsyncadd [#allocation3], 0
      %s16 = sshll.u32 %s0, 4
      %s17 = int_to_ptr.hbm [resolvable:$true] %s16
      %s18 = sshll.u32 [#allocation2], 4
      %s19 = int_to_ptr.vmem [resolvable:$true] %s18
      %21 = dma.hbm_to_vmem [thread:$0]  %s17, 128, %s19, [#allocation3]
    $region5: #{probs_fn.1} parent=1 // pred_fallthru
      _
    // Predicated region
    $region6: #{probs_fn.1} parent=1 // pred_check
      _
    $region7: #{probs_fn.1} parent=1 // pred_check_branch
      %23 = sbr.rel (0) target = $region9
    $region8: #{probs_fn.1} parent=1 // pred_region
      %25 = vsyncadd [#allocation6], 0
      %s26 = sshll.u32 %s1, 4
      %s27 = int_to_ptr.hbm [resolvable:$true] %s26
      %s28 = sshll.u32 [#allocation5], 4
      %s29 = int_to_ptr.vmem [resolvable:$true] %s28
      %34 = dma.hbm_to_vmem [thread:$0]  %s27, 256, %s29, [#allocation6], 64, 64, 4
    $region9: #{probs_fn.1} parent=1 // pred_fallthru
      _
    // Predicated region
    $region10: #{probs_fn.1} parent=1 // pred_check
      _
    $region11: #{probs_fn.1} parent=1 // pred_check_branch
      %36 = sbr.rel (0) target = $region13
    $region12: #{probs_fn.1} parent=1 // pred_region
      _
    $region13: #{probs_fn.1} parent=1 // pred_fallthru
      _
    // Predicated region
    $region14: #{probs_fn.1} parent=1 // pred_check
      _
    $region15: #{probs_fn.1} parent=1 // pred_check_branch
      %38 = sbr.rel (0) target = $region17
    $region16: #{probs_fn.1} parent=1 // pred_region
      %40 = dma.done [#allocation3], 128
    $region17: #{probs_fn.1} parent=1 // pred_fallthru
      _
    // Predicated region
    $region18: #{probs_fn.1} parent=1 // pred_check
      _
    $region19: #{probs_fn.1} parent=1 // pred_check_branch
      %42 = sbr.rel (0) target = $region21
    $region20: #{probs_fn.1} parent=1 // pred_region
      %44 = dma.done [#allocation6], 256
    $region21: #{probs_fn.1} parent=1 // pred_fallthru
      _
    %v46 = vld [vmem:[#allocation2] sm:$0xff]
    %v47 = vpack.c.bf16 %v46, %v46
    %v48 = vld [vmem:[#allocation5] sm:$0xf]
    %v49 = vld [vmem:[#allocation5 + $0x4] sm:$0xf]
    %v50 = vld [vmem:[#allocation5 + $0x8] sm:$0xf]
    %v51 = vld [vmem:[#allocation5 + $0xc] sm:$0xf]
    %v52 = vld [vmem:[%s2] sm:$0x1]
    %v54 = vperm.slane %v52, 0
    %v60 = vunpack.c.l.b16 %v48
    %v61 = vunpack.c.l.b16 %v49
    %v62 = vunpack.c.l.b16 %v50
    %v63 = vunpack.c.l.b16 %v51
    %v64 = vpack.c.b16 %v61, %v60
    %v65 = vpack.c.b16 %v63, %v62
    %vm68 = vcmask 261120
    %v70 = vsel %vm68, %v47, 0
    %72 = vmatpush.bf16.msra.mxu0 0
    %73 = vmatpush.bf16.msra.mxu0 0
    %74 = vmatpush.bf16.msra.mxu0 0
    %75 = vmatpush.bf16.msra.mxu0 0
    %76 = vmatpush.bf16.msra.mxu0 0
    %77 = vmatpush.bf16.msra.mxu0 0
    %78 = vmatpush.bf16.msra.mxu0 %v65
    %79 = vmatpush.bf16.msra.mxu0 %v64
    %80 = vmatmul.bf16.gmra.mxu0 %v70
    %v81 = vpop.f32.mrf.mxu0
    %v82 = vadd.f32 %v54, %v81
    %v83 = vpop.f32.mrf.mxu0
    %84 = vdwg.mxu0
    %85 = vmax.xlane.f32.xlu0 %v82
    %v86 = vpop.xlane.xlu0 %85
    %v87 = vsub.f32 %v82, %v86
    %v88 = vmul.f32 %v87, 1.442695
    %v89 = vpow.pop %v88
    %90 = vadd.xlane.f32.xlu0 %v89
    %v91 = vpop.xlane.xlu0 %90
    %v92 = vrcp.pop %v91
    %v93 = vmul.f32 %v89, %v92
    %94 = vst [vmem:[#allocation7] sm:$0xff] %v93
    // Predicated region
    $region22: #{probs_fn.1} parent=1 // pred_check
      _
    $region23: #{probs_fn.1} parent=1 // pred_check_branch
      %96 = sbr.rel (0) target = $region25
    $region24: #{probs_fn.1} parent=1 // pred_region
      %98 = vsyncadd [#allocation4], 0
      %s100 = sshll.u32 [#allocation7], 4
      %s101 = int_to_ptr.vmem [resolvable:$true] %s100
      %s102 = sshll.u32 %s3, 4
      %s103 = int_to_ptr.hbm [resolvable:$true] %s102
      %105 = dma.vmem_to_hbm [thread:$0]  %s101, 128, %s103, [#allocation4]
    $region25: #{probs_fn.1} parent=1 // pred_fallthru
      _
    // Predicated region
    $region26: #{probs_fn.1} parent=1 // pred_check
      _
    $region27: #{probs_fn.1} parent=1 // pred_check_branch
      %107 = sbr.rel (0) target = $region29
    $region28: #{probs_fn.1} parent=1 // pred_region
      %109 = dma.done [#allocation4], 128
    $region29: #{probs_fn.1} parent=1 // pred_fallthru
      _
    %110 = vsyncpa [#allocation3], 1
    %111 = vsyncpa [#allocation6], 1
    %112 = vsyncpa [#allocation4], 1

</llo_original>
